<compile_context>
chip_gen: v6e
topology: v6e:2x2x1
jax: 0.10.0
libtpu: 0.0.40
codegen_flags: <defaults>
</compile_context>

<pallas_src>
import functools

import jax
import jax.numpy as jnp
from jax.experimental import pallas as pl
from jax.experimental.pallas import tpu as pltpu

_LANE = 128
# Conservative sizing budget (fits v7x's 64 MiB physical VMEM with headroom for
# double-buffering) and the explicit scoped limit handed to Mosaic so larger
# tiles still compile on v5e's 16 MiB default scoped VMEM.
_VMEM_SIZING_BUDGET = 24 * 1024 * 1024
_VMEM_LIMIT_BYTES = 40 * 1024 * 1024
_MAX_HW_TILE = 8192                    # streaming path x-block lane extent cap
_STREAM_BLOCK_TARGET = 2 * 1024 * 1024  # ~2 MiB x blocks (near HBM roofline)


def _min_c_tile(dtype):
    itemsize = jnp.dtype(dtype).itemsize
    if itemsize >= 4:
        return 8
    if itemsize == 2:
        return 16
    return 32


# --------------------------------------------------------------------------- #
# Path A: resident-slab single pass (1 HBM read + 1 HBM write)
# --------------------------------------------------------------------------- #
def _bn_resident_kernel(x_ref, gamma_ref, beta_ref, o_ref, *,
                        eps, inv_m, pad_count):
    # x_ref: (N, c_t, HWp).  The whole channel-block slab is VMEM-resident, so
    # x is read from HBM exactly once and a true two-pass variance is free.
    x = x_ref[...].astype(jnp.float32)
    s = jnp.sum(jnp.sum(x, axis=2, keepdims=True), axis=0, keepdims=True)
    mean = s * inv_m                                     # (1, c_t, 1)
    d = x - mean
    ssd = jnp.sum(jnp.sum(d * d, axis=2, keepdims=True), axis=0, keepdims=True)
    # Zero lane-padding contributes pad_count * mean^2 to ssd; subtract exactly.
    var = jnp.maximum((ssd - pad_count * mean * mean) * inv_m, 0.0)
    inv_std = jax.lax.rsqrt(var + eps)
    scale = gamma_ref[...].astype(jnp.float32)[None] * inv_std   # (1, c_t, 1)
    shift = beta_ref[...].astype(jnp.float32)[None] - mean * scale
    o_ref[...] = (x * scale + shift).astype(o_ref.dtype)


def _pick_resident_c_tile(c, n, hw_pad, min_c, itemsize, c_tile=None):
    """Largest channel tile whose (N, c_t, HWp) slab fits the VMEM budget.

    Returns None when even the smallest legal tile does not fit (streaming
    fallback is used instead).
    """
    # Per slab element: double-buffered input + double-buffered output +
    # ~4 transient f32 copies inside the kernel body.
    per_elem = 4 * itemsize + 16
    if c_tile is not None:
        cands = [c_tile]
    elif c % min_c == 0:
        cands = [t for t in range(min_c, c + 1, min_c) if c % t == 0]
    else:
        cands = [c]                       # full-dim block is always legal
    fitting = [t for t in cands if n * t * hw_pad * per_elem <= _VMEM_SIZING_BUDGET]
    if not fitting:
        return None
    # Keep the (single) parallel grid axis >= 2 when possible so the second
    # TensorCore on v7x has work.
    parallel = [t for t in fitting if c // t >= 2]
    return max(parallel) if parallel else max(fitting)


def _bn_resident_call(x3, gamma2, beta2, c_t, eps, inv_m, pad_count):
    n, c, hw_pad = (int(d) for d in x3.shape)
    itemsize = jnp.dtype(x3.dtype).itemsize
    kernel = functools.partial(_bn_resident_kernel, eps=float(eps),
                               inv_m=float(inv_m), pad_count=float(pad_count))
    cost = pl.CostEstimate(
        flops=7 * n * c * hw_pad,
        transcendentals=c,
        bytes_accessed=2 * n * c * hw_pad * itemsize + 2 * c * 4,
    )
    return pl.pallas_call(
        kernel,
        out_shape=jax.ShapeDtypeStruct((n, c, hw_pad), x3.dtype),
        grid_spec=pltpu.PrefetchScalarGridSpec(
            num_scalar_prefetch=0,
            grid=(c // c_t,),
            in_specs=[
                pl.BlockSpec((n, c_t, hw_pad), lambda ci: (0, ci, 0)),
                pl.BlockSpec((c_t, 1), lambda ci: (ci, 0)),
                pl.BlockSpec((c_t, 1), lambda ci: (ci, 0)),
            ],
            out_specs=pl.BlockSpec((n, c_t, hw_pad), lambda ci: (0, ci, 0)),
        ),
        compiler_params=pltpu.CompilerParams(
            dimension_semantics=("parallel",),
            vmem_limit_bytes=_VMEM_LIMIT_BYTES,
        ),
        cost_estimate=cost,
    )(x3, gamma2, beta2)


# --------------------------------------------------------------------------- #
# Path B: streaming fallback (stats pass + normalize pass, 2 reads + 1 write)
# --------------------------------------------------------------------------- #
def _bn_stats_kernel(x_ref, gamma_ref, beta_ref, scale_ref, shift_ref,
                     acc_s, acc_q, *, eps, inv_m, n_strips):
    ni = pl.program_id(1)
    mi = pl.program_id(2)

    @pl.when(jnp.logical_and(ni == 0, mi == 0))
    def _init():
        acc_s[...] = jnp.zeros_like(acc_s)
        acc_q[...] = jnp.zeros_like(acc_q)

    x = x_ref[0].astype(jnp.float32)                # (c_t, hw_t)
    # Fold 128-lane strips into narrow accumulators (pure VPU adds); the single
    # cross-lane reduce per channel block is deferred to the final step.
    ps = x[:, 0:_LANE]
    pq = ps * ps
    for si in range(1, n_strips):
        strip = x[:, si * _LANE:(si + 1) * _LANE]
        ps = ps + strip
        pq = pq + strip * strip
    acc_s[...] += ps
    acc_q[...] += pq

    last = jnp.logical_and(ni == pl.num_programs(1) - 1,
                           mi == pl.num_programs(2) - 1)

    @pl.when(last)
    def _finalize():
        s = jnp.sum(acc_s[...], axis=1, keepdims=True)        # (c_t, 1)
        q = jnp.sum(acc_q[...], axis=1, keepdims=True)
        mean = s * inv_m
        # TODO(synk): E[x^2]-mean^2 can lose precision when |mean| >> std over
        # very large N*H*W; a pilot-mean shift would harden this fallback path.
        var = jnp.maximum(q * inv_m - mean * mean, 0.0)
        inv_std = jax.lax.rsqrt(var + eps)
        scale = gamma_ref[...].astype(jnp.float32) * inv_std
        scale_ref[...] = scale
        shift_ref[...] = beta_ref[...].astype(jnp.float32) - mean * scale


def _bn_norm_kernel(x_ref, scale_ref, shift_ref, o_ref):
    x = x_ref[0].astype(jnp.float32)
    o_ref[0] = (x * scale_ref[...] + shift_ref[...]).astype(o_ref.dtype)


def _pick_stream_hw_tile(hw_pad, hw_tile=None):
    if hw_tile is not None:
        return hw_tile
    best = _LANE
    for k in range(min(hw_pad, _MAX_HW_TILE) // _LANE, 0, -1):
        t = k * _LANE
        if hw_pad % t == 0:
            best = t
            break
    return best


def _pick_stream_c_tile(c, min_c, hw_t, itemsize, c_tile=None):
    if c_tile is not None:
        return c_tile
    if c % min_c != 0:
        return c
    cands = [t for t in range(min_c, c + 1, min_c) if c % t == 0]
    fitting = [t for t in cands if t * hw_t * itemsize <= _STREAM_BLOCK_TARGET]
    if not fitting:
        fitting = [min_c]
    parallel = [t for t in fitting if c // t >= 2]
    return max(parallel) if parallel else max(fitting)


def _bn_streaming_call(x3, gamma2, beta2, c_t, hw_t, eps, inv_m):
    n, c, hw_pad = (int(d) for d in x3.shape)
    itemsize = jnp.dtype(x3.dtype).itemsize
    grid = (c // c_t, n, hw_pad // hw_t)

    stats_kernel = functools.partial(
        _bn_stats_kernel, eps=float(eps), inv_m=float(inv_m),
        n_strips=hw_t // _LANE)

    scale, shift = pl.pallas_call(
        stats_kernel,
        out_shape=(jax.ShapeDtypeStruct((c, 1), jnp.float32),
                   jax.ShapeDtypeStruct((c, 1), jnp.float32)),
        grid_spec=pltpu.PrefetchScalarGridSpec(
            num_scalar_prefetch=0,
            grid=grid,
            in_specs=[
                pl.BlockSpec((1, c_t, hw_t), lambda ci, ni, mi: (ni, ci, mi)),
                pl.BlockSpec((c_t, 1), lambda ci, ni, mi: (ci, 0)),
                pl.BlockSpec((c_t, 1), lambda ci, ni, mi: (ci, 0)),
            ],
            out_specs=(
                pl.BlockSpec((c_t, 1), lambda ci, ni, mi: (ci, 0)),
                pl.BlockSpec((c_t, 1), lambda ci, ni, mi: (ci, 0)),
            ),
            scratch_shapes=[
                pltpu.VMEM((c_t, _LANE), jnp.float32),   # running sum(x)
                pltpu.VMEM((c_t, _LANE), jnp.float32),   # running sum(x*x)
            ],
        ),
        compiler_params=pltpu.CompilerParams(
            dimension_semantics=("parallel", "arbitrary", "arbitrary"),
            vmem_limit_bytes=_VMEM_LIMIT_BYTES,
        ),
        cost_estimate=pl.CostEstimate(
            flops=3 * n * c * hw_pad, transcendentals=c,
            bytes_accessed=n * c * hw_pad * itemsize + 2 * c * 4),
    )(x3, gamma2, beta2)

    y3 = pl.pallas_call(
        _bn_norm_kernel,
        out_shape=jax.ShapeDtypeStruct((n, c, hw_pad), x3.dtype),
        grid_spec=pltpu.PrefetchScalarGridSpec(
            num_scalar_prefetch=0,
            grid=grid,
            in_specs=[
                pl.BlockSpec((1, c_t, hw_t), lambda ci, ni, mi: (ni, ci, mi)),
                pl.BlockSpec((c_t, 1), lambda ci, ni, mi: (ci, 0)),
                pl.BlockSpec((c_t, 1), lambda ci, ni, mi: (ci, 0)),
            ],
            out_specs=pl.BlockSpec((1, c_t, hw_t),
                                   lambda ci, ni, mi: (ni, ci, mi)),
        ),
        compiler_params=pltpu.CompilerParams(
            dimension_semantics=("parallel", "parallel", "arbitrary"),
            vmem_limit_bytes=_VMEM_LIMIT_BYTES,
        ),
        cost_estimate=pl.CostEstimate(
            flops=2 * n * c * hw_pad, transcendentals=0,
            bytes_accessed=2 * n * c * hw_pad * itemsize + 2 * c * 4),
    )(x3, scale, shift)
    return y3


# --------------------------------------------------------------------------- #
# Public wrapper
# --------------------------------------------------------------------------- #
def bn_wrapper_forward(x_nchw, gamma, beta, eps=1e-5, *,
                       c_tile=None, hw_tile=None, force_streaming=False):
    """Training-mode BatchNorm2d forward (_BNWrapper.forward) via Pallas.

    x_nchw: (N, C, H, W); gamma, beta: (C,).
    """
    n, c, h, w = (int(d) for d in x_nchw.shape)
    hw = h * w
    hw_pad = -(-hw // _LANE) * _LANE
    itemsize = jnp.dtype(x_nchw.dtype).itemsize
    min_c = _min_c_tile(x_nchw.dtype)

    x3 = x_nchw.reshape(n, c, hw)                 # free reshape, no transpose
    if hw_pad != hw:
        # Lane-dense layout: pad H*W up to a 128 multiple once in HBM.  Zero
        # padding contributes nothing to sum / sum-of-squares; padded output
        # columns are sliced off below.
        x3 = jnp.pad(x3, ((0, 0), (0, 0), (0, hw_pad - hw)))
    gamma2 = gamma.reshape(c, 1).astype(jnp.float32)
    beta2 = beta.reshape(c, 1).astype(jnp.float32)
    inv_m = 1.0 / float(n * hw)
    pad_count = float(n * (hw_pad - hw))

    c_t_res = None
    if not force_streaming:
        c_t_res = _pick_resident_c_tile(c, n, hw_pad, min_c, itemsize, c_tile)

    if c_t_res is not None:
        assert c % c_t_res == 0
        y3 = _bn_resident_call(x3, gamma2, beta2, c_t_res, eps, inv_m, pad_count)
    else:
        hw_t = _pick_stream_hw_tile(hw_pad, hw_tile)
        c_t = _pick_stream_c_tile(c, min_c, hw_t, itemsize, c_tile)
        assert c % c_t == 0 and hw_pad % hw_t == 0
        y3 = _bn_streaming_call(x3, gamma2, beta2, c_t, hw_t, eps, inv_m)

    if hw_pad != hw:
        y3 = y3[:, :, :hw]
    return y3.reshape(n, c, h, w)


# --------------------------------------------------------------------------- #
# Self-test
# --------------------------------------------------------------------------- #
if __name__ == "__main__":
    key = jax.random.PRNGKey(0)
    kx, kg, kb = jax.random.split(key, 3)

    def reference(x, gamma, beta, eps):
        xf = x.astype(jnp.float32)
        mean = jnp.mean(xf, axis=(0, 2, 3), keepdims=True)
        var = jnp.mean((xf - mean) ** 2, axis=(0, 2, 3), keepdims=True)
        y = (xf - mean) * jax.lax.rsqrt(var + eps)
        y = y * gamma.reshape(1, -1, 1, 1) + beta.reshape(1, -1, 1, 1)
        return y.astype(x.dtype)

    def check(name, x, gamma, beta, atol, **kw):
        y = bn_wrapper_forward(x, gamma, beta, eps=1e-5, **kw)
        jax.block_until_ready(y)
        assert y.shape == x.shape and y.dtype == x.dtype, name
        ref = reference(x, gamma, beta, 1e-5)
        err = float(jnp.max(jnp.abs(y.astype(jnp.float32)
                                    - ref.astype(jnp.float32))))
        assert err <= atol, (name, err)

    N, C, H, W = 2, 16, 16, 16
    x = jax.random.normal(kx, (N, C, H, W), dtype=jnp.float32) * 2.0 + 0.5
    # BatchNorm2d(C) init is weight=1, bias=0; perturb so the affine path is
    # actually exercised.
    gamma = 1.0 + 0.1 * jax.random.normal(kg, (C,), dtype=jnp.float32)
    beta = 0.1 * jax.random.normal(kb, (C,), dtype=jnp.float32)

    # 1) resident-slab single-pass path (default for these shapes)
    check("resident_f32", x, gamma, beta, atol=1e-4)
    # 2) streaming two-call fallback with small tiles so every grid axis,
    #    the accumulators and the finalize step are exercised
    check("streaming_f32", x, gamma, beta, atol=1e-4,
          force_streaming=True, c_tile=8, hw_tile=128)
    # 3) H*W not a multiple of 128 -> lane-padding path
    x7 = jax.random.normal(kx, (2, 16, 7, 7), dtype=jnp.float32) + 0.25
    check("resident_pad_f32", x7, gamma, beta, atol=1e-4)
    # 4) bf16 activations (dtype-aware channel tiling: 16-sublane minimum)
    xb = (jax.random.normal(kx, (2, 16, 16, 16), dtype=jnp.float32) * 2.0
          + 0.5).astype(jnp.bfloat16)
    check("resident_bf16", xb, gamma, beta, atol=6e-2)

    print("KERNEL_OK")
</pallas_src>

<mosaic_0001>
module attributes {stable_mosaic.version = 11 : i64} {
  func.func @_bn_resident_kernel(%arg0: i32, %arg1: memref<2x8x256xf32, #tpu.memory_space<vmem>>, %arg2: memref<8x1xf32, #tpu.memory_space<vmem>>, %arg3: memref<8x1xf32, #tpu.memory_space<vmem>>, %arg4: memref<2x8x256xf32, #tpu.memory_space<vmem>>) attributes {dimension_semantics = [#tpu.dimension_semantics<parallel>], iteration_bounds = array<i64: 2>, scalar_prefetch = 0 : i64, scratch_operands = 0 : i64, tpu.core_type = #tpu.core_type<tc>, window_params = [{transform_indices = @transform_0, window_bounds = array<i64: 2, 8, 256>}, {transform_indices = @transform_1, window_bounds = array<i64: 8, 1>}, {transform_indices = @transform_2, window_bounds = array<i64: 8, 1>}, {transform_indices = @transform_3, window_bounds = array<i64: 2, 8, 256>}]} {
    %c0 = arith.constant 0 : index
    %c0_0 = arith.constant 0 : index
    %c0_1 = arith.constant 0 : index
    %0 = vector.load %arg1[%c0, %c0_0, %c0_1] : memref<2x8x256xf32, #tpu.memory_space<vmem>>, vector<2x8x256xf32>
    %cst = arith.constant dense<0.000000e+00> : vector<2x8xf32>
    %1 = vector.multi_reduction <add>, %0, %cst [2] : vector<2x8x256xf32> to vector<2x8xf32>
    %2 = vector.shape_cast %1 : vector<2x8xf32> to vector<2x8x1xf32>
    %cst_2 = arith.constant dense<0.000000e+00> : vector<8x1xf32>
    %3 = vector.multi_reduction <add>, %2, %cst_2 [0] : vector<2x8x1xf32> to vector<8x1xf32>
    %4 = vector.shape_cast %3 : vector<8x1xf32> to vector<1x8x1xf32>
    %cst_3 = arith.constant 0.001953125 : f32
    %5 = vector.broadcast %cst_3 : f32 to vector<1x8x1xf32>
    %6 = arith.mulf %4, %5 : vector<1x8x1xf32>
    %7 = vector.broadcast %6 : vector<1x8x1xf32> to vector<2x8x256xf32>
    %8 = arith.subf %0, %7 : vector<2x8x256xf32>
    %9 = arith.mulf %8, %8 : vector<2x8x256xf32>
    %cst_4 = arith.constant dense<0.000000e+00> : vector<2x8xf32>
    %10 = vector.multi_reduction <add>, %9, %cst_4 [2] : vector<2x8x256xf32> to vector<2x8xf32>
    %11 = vector.shape_cast %10 : vector<2x8xf32> to vector<2x8x1xf32>
    %cst_5 = arith.constant dense<0.000000e+00> : vector<8x1xf32>
    %12 = vector.multi_reduction <add>, %11, %cst_5 [0] : vector<2x8x1xf32> to vector<8x1xf32>
    %13 = vector.shape_cast %12 : vector<8x1xf32> to vector<1x8x1xf32>
    %cst_6 = arith.constant 0.000000e+00 : f32
    %14 = vector.broadcast %cst_6 : f32 to vector<1x8x1xf32>
    %15 = arith.mulf %14, %6 : vector<1x8x1xf32>
    %16 = arith.mulf %15, %6 : vector<1x8x1xf32>
    %17 = arith.subf %13, %16 : vector<1x8x1xf32>
    %cst_7 = arith.constant 0.001953125 : f32
    %18 = vector.broadcast %cst_7 : f32 to vector<1x8x1xf32>
    %19 = arith.mulf %17, %18 : vector<1x8x1xf32>
    %cst_8 = arith.constant 0.000000e+00 : f32
    %20 = vector.broadcast %cst_8 : f32 to vector<1x8x1xf32>
    %21 = arith.maximumf %19, %20 : vector<1x8x1xf32>
    %cst_9 = arith.constant 9.99999974E-6 : f32
    %22 = vector.broadcast %cst_9 : f32 to vector<1x8x1xf32>
    %23 = arith.addf %21, %22 : vector<1x8x1xf32>
    %24 = math.rsqrt %23 : vector<1x8x1xf32>
    %c0_10 = arith.constant 0 : index
    %c0_11 = arith.constant 0 : index
    %25 = vector.load %arg2[%c0_10, %c0_11] : memref<8x1xf32, #tpu.memory_space<vmem>>, vector<8x1xf32>
    %26 = vector.shape_cast %25 : vector<8x1xf32> to vector<1x8x1xf32>
    %27 = arith.mulf %26, %24 : vector<1x8x1xf32>
    %c0_12 = arith.constant 0 : index
    %c0_13 = arith.constant 0 : index
    %28 = vector.load %arg3[%c0_12, %c0_13] : memref<8x1xf32, #tpu.memory_space<vmem>>, vector<8x1xf32>
    %29 = vector.shape_cast %28 : vector<8x1xf32> to vector<1x8x1xf32>
    %30 = arith.mulf %6, %27 : vector<1x8x1xf32>
    %31 = arith.subf %29, %30 : vector<1x8x1xf32>
    %32 = vector.broadcast %27 : vector<1x8x1xf32> to vector<2x8x256xf32>
    %33 = arith.mulf %0, %32 : vector<2x8x256xf32>
    %34 = vector.broadcast %31 : vector<1x8x1xf32> to vector<2x8x256xf32>
    %35 = arith.addf %33, %34 : vector<2x8x256xf32>
    %c0_14 = arith.constant 0 : index
    %c0_15 = arith.constant 0 : index
    %c0_16 = arith.constant 0 : index
    %36 = vector.load %arg4[%c0_14, %c0_15, %c0_16] : memref<2x8x256xf32, #tpu.memory_space<vmem>>, vector<2x8x256xf32>
    tpu.vector_store %arg4[%c0_14, %c0_15, %c0_16], %35 {strides = array<i32>} : memref<2x8x256xf32, #tpu.memory_space<vmem>>, vector<2x8x256xf32>,
    return
  }
  func.func @transform_0(%arg0: i32) -> (i32, i32, i32) {
    %c0_i32 = arith.constant 0 : i32
    %c0_i32_0 = arith.constant 0 : i32
    %c0_i32_1 = arith.constant 0 : i32
    return %c0_i32, %arg0, %c0_i32_0 : i32, i32, i32
  }
  func.func @transform_1(%arg0: i32) -> (i32, i32) {
    %c0_i32 = arith.constant 0 : i32
    %c0_i32_0 = arith.constant 0 : i32
    return %arg0, %c0_i32 : i32, i32
  }
  func.func @transform_2(%arg0: i32) -> (i32, i32) {
    %c0_i32 = arith.constant 0 : i32
    %c0_i32_0 = arith.constant 0 : i32
    return %arg0, %c0_i32 : i32, i32
  }
  func.func @transform_3(%arg0: i32) -> (i32, i32, i32) {
    %c0_i32 = arith.constant 0 : i32
    %c0_i32_0 = arith.constant 0 : i32
    %c0_i32_1 = arith.constant 0 : i32
    return %c0_i32, %arg0, %c0_i32_0 : i32, i32, i32
  }
}

</mosaic_0001>

<llo_original>
// kernel: tpu_custom_call.1
$region0: #{tpu_custom_call.1}
  #allocation0 [shape = 'u32[]', space=smem, size = 0x4, offset = 0x4, fixed_abs, tag = 'smem constant byte address 0x4 - core index']
  #allocation1 [shape = 'u32[144,128]{1,0:T(1,128)}', space=vmem, size = 0x12000, scoped, tag = 'internal scratch']
  %s0 = inlined_call_operand.hbm [shape: f32[2,16,256], index: 0, kind: input, shape index: {}]
  %s1 = inlined_call_operand.vmem [shape: f32[16,1], index: 1, kind: input, shape index: {}]
  %s2 = inlined_call_operand.vmem [shape: f32[16,1], index: 2, kind: input, shape index: {}]
  %s3 = inlined_call_operand.hbm [shape: f32[2,16,256], index: 3, kind: output, shape index: {}]
  %s4 = sld [smem:[#allocation0]]
  $region49: #{tpu_custom_call.1} parent=0
    _
  %s6 = ssub.s32 1, %s4
  %s7 = scalar_select 0, %s6, %s4
  $region1: #{tpu_custom_call.1} parent=0
    #allocation2 [shape = 'u8[32768]{0}', space=vmem, size = 0x8000, scoped, tag = 'input window, operand 0']
    #allocation3 [shape = 's32[2]{0}', space=sflag, size = 0x8, scoped, tag = 'scoped memory for tpu_custom_call.1']
    #allocation4 [shape = 's32[2]{0}', space=sflag, size = 0x8, scoped, tag = 'scoped memory for tpu_custom_call.1']
    #allocation5 [shape = 'u8[32768]{0}', space=vmem, size = 0x8000, scoped, tag = 'output window, operand 0']
    %8 = vsyncpa [#allocation3], 0
    %s9 = scalar_lea.sflag [#allocation3], 1
    %10 = vsyncpa %s9, 0
    %11 = vsyncpa [#allocation4], 0
    %s12 = scalar_lea.sflag [#allocation4], 1
    %13 = vsyncpa %s12, 0
    loop: start=0, step=1, limit=4
    $region2: #{tpu_custom_call.1} parent=1 // loop_pre_header
      _
    $region3: #{tpu_custom_call.1} parent=1 // loop_header
      %s15 = sphi 0, %s19
      %p16 = scmp.ge.s32.totalorder %s15, 4
      %s25 = sphi 0, %s27
      %s28 = sphi 0, %s25
      %s29 = sphi 0, %s28
      %s45 = sphi 0, %s29
      %s51 = sphi 0, %s53
      %s54 = sphi 0, %s51
      %s55 = sphi 0, %s54
      %s71 = sphi 0, %s55
      %s77 = sphi 0, %s79
      %s80 = sphi 0, %s77
      %s81 = sphi 0, %s80
      %s97 = sphi 0, %s81
      %s103 = sphi 0, %s105
      %s106 = sphi 0, %s103
      %s107 = sphi 0, %s106
      %s123 = sphi 0, %s107
    $region4: #{tpu_custom_call.1} parent=1 // loop_header_branch
      %18 = sbr.rel (%p16) target = $region8
    $region5: #{tpu_custom_call.1} parent=1 // loop_body
      %s20 = ssub.s32 %s15, 1
      %s21 = ssub.s32 %s15, 2
      %s22 = sadd.s32 %s15, 1
      %s23 = ssub.s32 %s15, %s22
      %p24 = scmp.eq.s32.totalorder %s23, 0
      %s26 = sadd.s32 %s25, 1
      %s27 = scalar_select %p24, %s25, %s26
      %p30 = pneg %p24
      %p31 = scmp.eq.s32.totalorder %s15, 1
      %p32 = por %p30, %p31
      %p33 = scmp.ne.s32.totalorder %s25, %s28
      %p34 = scmp.eq.s32.totalorder %s15, 0
      %p35 = por %p33, %p34
      %p36 = scmp.ne.s32.totalorder %s25, %s28
      %p37 = scmp.eq.s32.totalorder %s20, 1
      %p38 = por %p36, %p37
      %p39 = scmp.ne.s32.totalorder %s28, %s29
      %p40 = scmp.eq.s32.totalorder %s20, 0
      %p41 = por %p39, %p40
      %p42 = scmp.ne.s32.totalorder %s28, %s29
      %p43 = scmp.eq.s32.totalorder %s21, 1
      %p44 = por %p42, %p43
      %p46 = scmp.ne.s32.totalorder %s29, %s45
      %p47 = scmp.eq.s32.totalorder %s21, 0
      %p48 = por %p46, %p47
      %s49 = ssub.s32 %s15, %s22
      %p50 = scmp.eq.s32.totalorder %s49, 0
      %s52 = sadd.s32 %s51, 1
      %s53 = scalar_select %p50, %s51, %s52
      %p56 = pneg %p50
      %p57 = scmp.eq.s32.totalorder %s15, 1
      %p58 = por %p56, %p57
      %p59 = scmp.ne.s32.totalorder %s51, %s54
      %p60 = scmp.eq.s32.totalorder %s15, 0
      %p61 = por %p59, %p60
      %p62 = scmp.ne.s32.totalorder %s51, %s54
      %p63 = scmp.eq.s32.totalorder %s20, 1
      %p64 = por %p62, %p63
      %p65 = scmp.ne.s32.totalorder %s54, %s55
      %p66 = scmp.eq.s32.totalorder %s20, 0
      %p67 = por %p65, %p66
      %p68 = scmp.ne.s32.totalorder %s54, %s55
      %p69 = scmp.eq.s32.totalorder %s21, 1
      %p70 = por %p68, %p69
      %p72 = scmp.ne.s32.totalorder %s55, %s71
      %p73 = scmp.eq.s32.totalorder %s21, 0
      %p74 = por %p72, %p73
      %s75 = ssub.s32 %s15, %s22
      %p76 = scmp.eq.s32.totalorder %s75, 0
      %s78 = sadd.s32 %s77, 1
      %s79 = scalar_select %p76, %s77, %s78
      %p82 = pneg %p76
      %p83 = scmp.eq.s32.totalorder %s15, 1
      %p84 = por %p82, %p83
      %p85 = scmp.ne.s32.totalorder %s77, %s80
      %p86 = scmp.eq.s32.totalorder %s15, 0
      %p87 = por %p85, %p86
      %p88 = scmp.ne.s32.totalorder %s77, %s80
      %p89 = scmp.eq.s32.totalorder %s20, 1
      %p90 = por %p88, %p89
      %p91 = scmp.ne.s32.totalorder %s80, %s81
      %p92 = scmp.eq.s32.totalorder %s20, 0
      %p93 = por %p91, %p92
      %p94 = scmp.ne.s32.totalorder %s80, %s81
      %p95 = scmp.eq.s32.totalorder %s21, 1
      %p96 = por %p94, %p95
      %p98 = scmp.ne.s32.totalorder %s81, %s97
      %p99 = scmp.eq.s32.totalorder %s21, 0
      %p100 = por %p98, %p99
      %s101 = ssub.s32 %s15, %s22
      %p102 = scmp.eq.s32.totalorder %s101, 0
      %s104 = sadd.s32 %s103, 1
      %s105 = scalar_select %p102, %s103, %s104
      %p108 = pneg %p102
      %p109 = scmp.eq.s32.totalorder %s15, 1
      %p110 = por %p108, %p109
      %p111 = scmp.ne.s32.totalorder %s103, %s106
      %p112 = scmp.eq.s32.totalorder %s15, 0
      %p113 = por %p111, %p112
      %p114 = scmp.ne.s32.totalorder %s103, %s106
      %p115 = scmp.eq.s32.totalorder %s20, 1
      %p116 = por %p114, %p115
      %p117 = scmp.ne.s32.totalorder %s106, %s107
      %p118 = scmp.eq.s32.totalorder %s20, 0
      %p119 = por %p117, %p118
      %p120 = scmp.ne.s32.totalorder %s106, %s107
      %p121 = scmp.eq.s32.totalorder %s21, 1
      %p122 = por %p120, %p121
      %p124 = scmp.ne.s32.totalorder %s107, %s123
      %p125 = scmp.eq.s32.totalorder %s21, 0
      %p126 = por %p124, %p125
      %p127 = scmp.le.s32.totalorder 1, %s15
      %p128 = scmp.lt.s32.totalorder %s15, 3
      %p129 = pnand %p127, %p128
      %p130 = pneg %p129
      // Predicated region
      $region9: #{tpu_custom_call.1} parent=5 // pred_check
        _
      $region10: #{tpu_custom_call.1} parent=5 // pred_check_branch
        %132 = sbr.rel (%p129) target = $region12
      $region11: #{tpu_custom_call.1} parent=5 // pred_region
        %s133 = ssub.s32 %s15, 1
      $region12: #{tpu_custom_call.1} parent=5 // pred_fallthru
        _
      %p134 = scmp.lt.s32.totalorder %s15, 2
      // Predicated region
      $region13: #{tpu_custom_call.1} parent=5 // pred_check
        %p135 = pneg %p134
      $region14: #{tpu_custom_call.1} parent=5 // pred_check_branch
        %137 = sbr.rel (%p135) target = $region16
      $region15: #{tpu_custom_call.1} parent=5 // pred_region
        // Predicated region
        $region17: #{tpu_custom_call.1} parent=15 // pred_check
          %p138 = pneg %p35
        $region18: #{tpu_custom_call.1} parent=15 // pred_check_branch
          %140 = sbr.rel (%p138) target = $region20
        $region19: #{tpu_custom_call.1} parent=15 // pred_region
          %s141 = sand.u32 %s25, 1
          %s142 = scalar_lea.sflag [#allocation3], %s141
          %s143 = sand.u32 %s25, 1
          %s144 = smul.addr %s143, 32
          %s145 = scalar_lea.vmem [#allocation2], %s144
          %s147 = ssub.s32 512, 512
          %148 = vsyncadd %s142, %s147
          %s149 = smul.addr %s15, 2
          %s150 = smul.addr %s149, 128
          %s151 = scalar_lea.hbm %s0, %s150
          %s152 = sshll.u32 %s145, 4
          %s153 = int_to_ptr.vmem [resolvable:$true] %s152
          %158 = dma.hbm_to_vmem [thread:$0]  %s151, 512, %s153, %s142, 512, 256, 16
        $region20: #{tpu_custom_call.1} parent=15 // pred_fallthru
          _
        // Predicated region
        $region21: #{tpu_custom_call.1} parent=15 // pred_check
          %p159 = pneg %p61
        $region22: #{tpu_custom_call.1} parent=15 // pred_check_branch
          %161 = sbr.rel (%p159) target = $region24
        $region23: #{tpu_custom_call.1} parent=15 // pred_region
          %p162 = scmp.lt.s32.totalorder %s15, 1
          %s163 = scalar_select %p162, %s15, 1
          %s164 = smul.addr %s163, 8
          %s165 = scalar_lea.vmem %s1, %s164
        $region24: #{tpu_custom_call.1} parent=15 // pred_fallthru
          _
        // Predicated region
        $region25: #{tpu_custom_call.1} parent=15 // pred_check
          %p166 = pneg %p87
        $region26: #{tpu_custom_call.1} parent=15 // pred_check_branch
          %168 = sbr.rel (%p166) target = $region28
        $region27: #{tpu_custom_call.1} parent=15 // pred_region
          %p169 = scmp.lt.s32.totalorder %s15, 1
          %s170 = scalar_select %p169, %s15, 1
          %s171 = smul.addr %s170, 8
          %s172 = scalar_lea.vmem %s2, %s171
        $region28: #{tpu_custom_call.1} parent=15 // pred_fallthru
          _
      $region16: #{tpu_custom_call.1} parent=5 // pred_fallthru
        _
      %p173 = scmp.le.s32.totalorder 1, %s15
      %p174 = scmp.lt.s32.totalorder %s15, 3
      %p175 = pnand %p173, %p174
      %p176 = pneg %p175
      // Predicated region
      $region29: #{tpu_custom_call.1} parent=5 // pred_check
        _
      $region30: #{tpu_custom_call.1} parent=5 // pred_check_branch
        %178 = sbr.rel (%p175) target = $region32
      $region31: #{tpu_custom_call.1} parent=5 // pred_region
        %s179 = ssub.s32 %s15, 1
        %s180 = sand.u32 %s28, 1
        %s181 = scalar_lea.sflag [#allocation3], %s180
        %s182 = sand.u32 %s28, 1
        %s183 = smul.addr %s182, 32
        %s184 = scalar_lea.vmem [#allocation2], %s183
        // Predicated region
        $region33: #{tpu_custom_call.1} parent=31 // pred_check
          %p185 = pneg %p41
        $region34: #{tpu_custom_call.1} parent=31 // pred_check_branch
          %187 = sbr.rel (%p185) target = $region36
        $region35: #{tpu_custom_call.1} parent=31 // pred_region
          %188 = dma.done %s181, 512
        $region36: #{tpu_custom_call.1} parent=31 // pred_fallthru
          _
        %s189 = sand.u32 %s28, 1
        %s190 = scalar_lea.sflag [#allocation3], %s189
        %s191 = sand.u32 %s28, 1
        %s192 = smul.addr %s191, 32
        %s193 = scalar_lea.vmem [#allocation2], %s192
        %p194 = pneg %p41
        %p195 = pneg %p38
        %p196 = scmp.lt.s32.totalorder %s20, 1
        %s197 = scalar_select %p196, %s20, 1
        %s198 = smul.addr %s197, 8
        %s199 = scalar_lea.vmem %s1, %s198
        %p200 = pneg %p67
        %p201 = pneg %p64
        %p202 = scmp.lt.s32.totalorder %s20, 1
        %s203 = scalar_select %p202, %s20, 1
        %s204 = smul.addr %s203, 8
        %s205 = scalar_lea.vmem %s2, %s204
        %p206 = pneg %p93
        %p207 = pneg %p90
        %p208 = pneg %p119
        %p209 = pneg %p116
        %s210 = sand.u32 %s106, 1
        %s211 = scalar_lea.sflag [#allocation4], %s210
        %s212 = sand.u32 %s106, 1
        %s213 = smul.addr %s212, 32
        %s214 = scalar_lea.vmem [#allocation5], %s213
        %p215 = scmp.lt.s32.totalorder %s20, 1
        %s216 = scalar_select %p215, %s20, 1
        %s217 = smul.addr %s216, 8
        %s218 = scalar_lea.vmem %s1, %s217
        %p219 = scmp.lt.s32.totalorder %s20, 1
        %s220 = scalar_select %p219, %s20, 1
        %s221 = smul.addr %s220, 8
        %s222 = scalar_lea.vmem %s2, %s221
        %v223 = vld [vmem:[%s184] sm:$0xff]
        %v224 = vld [vmem:[%s184 + $0x8] sm:$0xff]
        %v225 = vld [vmem:[%s184 + $0x10] sm:$0xff]
        %v226 = vld [vmem:[%s184 + $0x18] sm:$0xff]
        %v227 = vadd.f32 %v223, %v224
        %228 = vadd.xlane.f32.xlu0 %v227
        %v229 = vpop.xlane.xlu0 %228
        %v230 = vadd.f32 %v225, %v226
        %231 = vadd.xlane.f32.xlu0 %v230
        %v232 = vpop.xlane.xlu0 %231
        %v233 = vadd.f32 %v229, %v232
        %v234 = vmul.f32 %v233, 0.001953125
        %v235 = vsub.f32 %v223, %v234
        %v236 = vsub.f32 %v224, %v234
        %v237 = vsub.f32 %v225, %v234
        %v238 = vsub.f32 %v226, %v234
        %v239 = vmul.f32 %v235, %v235
        %v240 = vmul.f32 %v236, %v236
        %v241 = vmul.f32 %v237, %v237
        %v242 = vmul.f32 %v238, %v238
        %v243 = vadd.f32 %v239, %v240
        %244 = vadd.xlane.f32.xlu0 %v243
        %v245 = vpop.xlane.xlu0 %244
        %v246 = vadd.f32 %v241, %v242
        %247 = vadd.xlane.f32.xlu0 %v246
        %v248 = vpop.xlane.xlu0 %247
        %v249 = vadd.f32 %v245, %v248
        %v250 = vmul.f32 %v234, 0.0
        %v251 = vmul.f32 %v250, %v234
        %v252 = vsub.f32 %v249, %v251
        %v253 = vmul.f32 %v252, 0.001953125
        %v254 = vmax.f32 %v253, 0.0
        %v255 = vadd.f32 %v254, 1e-05
        %v256 = vrsqrt.pop %v255
        %v257 = vld [vmem:[%s218] sm:$0xff]
        %v258 = vmul.f32 %v257, %v256
        %v259 = vld [vmem:[%s222] sm:$0xff]
        %v260 = vmul.f32 %v234, %v258
        %v261 = vsub.f32 %v259, %v260
        %263 = vset.pattern.permute.xlu0 0
        %264 = vperm.xlu0 %263, %v258
        %v265 = vpop.permute.xlu0 %264
        %v267 = vmul.f32 %v223, %v265
        %v268 = vmul.f32 %v224, %v265
        %v269 = vmul.f32 %v225, %v265
        %v270 = vmul.f32 %v226, %v265
        %272 = vset.pattern.permute.xlu0 0
        %273 = vperm.xlu0 %272, %v261
        %v274 = vpop.permute.xlu0 %273
        %v276 = vadd.f32 %v267, %v274
        %v277 = vadd.f32 %v268, %v274
        %v278 = vadd.f32 %v269, %v274
        %v279 = vadd.f32 %v270, %v274
        %280 = vst [vmem:[%s214] sm:$0xff] %v276
        %281 = vst [vmem:[%s214 + $0x8] sm:$0xff] %v277
        %282 = vst [vmem:[%s214 + $0x10] sm:$0xff] %v278
        %283 = vst [vmem:[%s214 + $0x18] sm:$0xff] %v279
        %s284 = sand.u32 %s106, 1
        %s285 = scalar_lea.sflag [#allocation4], %s284
        %s286 = sand.u32 %s106, 1
        %s287 = smul.addr %s286, 32
        %s288 = scalar_lea.vmem [#allocation5], %s287
        // Predicated region
        $region37: #{tpu_custom_call.1} parent=31 // pred_check
          %p289 = pneg %p116
        $region38: #{tpu_custom_call.1} parent=31 // pred_check_branch
          %291 = sbr.rel (%p289) target = $region40
        $region39: #{tpu_custom_call.1} parent=31 // pred_region
          %s293 = ssub.s32 512, 512
          %294 = vsyncadd %s285, %s293
          %s295 = smul.addr %s20, 2
          %s296 = smul.addr %s295, 128
          %s297 = scalar_lea.hbm %s3, %s296
          %s298 = sshll.u32 %s288, 4
          %s299 = int_to_ptr.vmem [resolvable:$true] %s298
          %304 = dma.vmem_to_hbm [thread:$0]  %s299, 512, %s297, %s285, 256, 512, 16
        $region40: #{tpu_custom_call.1} parent=31 // pred_fallthru
          _
      $region32: #{tpu_custom_call.1} parent=5 // pred_fallthru
        _
      %p305 = scmp.le.s32.totalorder 2, %s15
      // Predicated region
      $region41: #{tpu_custom_call.1} parent=5 // pred_check
        %p306 = pneg %p305
      $region42: #{tpu_custom_call.1} parent=5 // pred_check_branch
        %308 = sbr.rel (%p306) target = $region44
      $region43: #{tpu_custom_call.1} parent=5 // pred_region
        %s309 = ssub.s32 %s15, 2
        // Predicated region
        $region45: #{tpu_custom_call.1} parent=43 // pred_check
          %p310 = pneg %p122
        $region46: #{tpu_custom_call.1} parent=43 // pred_check_branch
          %312 = sbr.rel (%p310) target = $region48
        $region47: #{tpu_custom_call.1} parent=43 // pred_region
          %s313 = sand.u32 %s107, 1
          %s314 = scalar_lea.sflag [#allocation4], %s313
          %s315 = sand.u32 %s107, 1
          %s316 = smul.addr %s315, 32
          %s317 = scalar_lea.vmem [#allocation5], %s316
          %318 = dma.done %s314, 512
        $region48: #{tpu_custom_call.1} parent=43 // pred_fallthru
          _
      $region44: #{tpu_custom_call.1} parent=5 // pred_fallthru
        _
    $region6: #{tpu_custom_call.1} parent=1 // loop_footer
      %s19 = sadd.s32 1, %s15
    $region7: #{tpu_custom_call.1} parent=1 // loop_footer_branch
      %14 = sbr.rel target = $region3
    $region8: #{tpu_custom_call.1} parent=1 // loop_exit
      _
    %319 = vsyncpa [#allocation3], 1
    %s320 = scalar_lea.sflag [#allocation3], 1
    %321 = vsyncpa %s320, 1
    %322 = vsyncpa [#allocation4], 1
    %s323 = scalar_lea.sflag [#allocation4], 1
    %324 = vsyncpa %s323, 1

</llo_original>
